<compile_context>
chip_gen: v5e
topology: v5e:2x2
jax: 0.10.0
libtpu: 0.0.40
codegen_flags: <defaults>
</compile_context>

<pallas_src>
import functools

import jax
import jax.numpy as jnp
from jax.experimental import pallas as pl
from jax.experimental.pallas import tpu as pltpu


# ----------------------------------------------------------------------------
# Pallas kernel: fused windowing + matmul + bias + LeakyReLU
# ----------------------------------------------------------------------------
def _conv_kernel(T, DQ, alpha, x_ref, w_ref, b_ref, o_ref):
    # x_ref: (1, SC, T+H) bf16 slab  (SC = stride*C_in, time-minor => lane dense)
    # w_ref: (DQ, C_out, SC) bf16    (packed taps, zero-padded to DQ*stride)
    # b_ref: (C_out, 1) f32
    # o_ref: (1, C_out, T) f32
    slab = x_ref[0]                                     # (SC, T+H)
    acc = jnp.dot(w_ref[0], slab[:, 0:T],
                  preferred_element_type=jnp.float32)   # (C_out, T) f32
    for dq in range(1, DQ):                             # static, unrolled
        acc = acc + jnp.dot(w_ref[dq], slab[:, dq:dq + T],
                            preferred_element_type=jnp.float32)
    acc = acc + b_ref[...]                              # broadcast (C_out,1)
    # LeakyReLU(alpha) with 0 < alpha < 1: max(x, alpha*x)
    acc = jnp.maximum(acc, alpha * acc)
    o_ref[0] = acc.astype(o_ref.dtype)


def _conv_leakyrelu_pallas(x_slab, w_packed, b2d, *, N, J, T, H, DQ, Cout, SC,
                           Lq, alpha):
    kernel = functools.partial(_conv_kernel, T, DQ, float(alpha))
    cost = pl.CostEstimate(
        flops=2 * N * Lq * Cout * SC * DQ,
        transcendentals=0,
        bytes_accessed=int(x_slab.size * x_slab.dtype.itemsize
                           + w_packed.size * w_packed.dtype.itemsize
                           + b2d.size * 4 + N * Cout * Lq * 4))
    return pl.pallas_call(
        kernel,
        out_shape=jax.ShapeDtypeStruct((N, Cout, Lq), jnp.float32),
        grid=(N, J),
        in_specs=[
            # per-(batch, tile) input slab with halo; full last-two dims
            pl.BlockSpec((1, SC, T + H), lambda n, j: (n * J + j, 0, 0)),
            # packed weights: resident, constant block
            pl.BlockSpec((DQ, Cout, SC), lambda n, j: (0, 0, 0)),
            # bias: tiny constant block
            pl.BlockSpec((Cout, 1), lambda n, j: (0, 0)),
        ],
        out_specs=pl.BlockSpec((1, Cout, T), lambda n, j: (n, 0, j)),
        compiler_params=pltpu.CompilerParams(
            dimension_semantics=("parallel", "parallel"),
            vmem_limit_bytes=48 * 1024 * 1024),
        cost_estimate=cost,
    )(x_slab, w_packed, b2d)


# ----------------------------------------------------------------------------
# PhaseShuffle index math (matches torch reflect-pad semantics)
# ----------------------------------------------------------------------------
def _phase_shuffle_indices(k_list, L):
    """Per-batch source index along time for shift k in [-shift, shift]."""
    i = jnp.arange(L)

    def one(k):
        # k >= 0: reflect-pad left by k of x[..., :L-k]  ->  src = |i - k|
        pos = jnp.abs(i - k)
        # k < 0 (m = -k): reflect-pad right by m of x[..., m:]
        m = -k
        last = L - m - 1
        neg = m + jnp.where(i <= last, i, 2 * last - i)
        return jnp.where(k >= 0, pos, neg)

    return jax.vmap(one)(k_list)  # (N, L)


# ----------------------------------------------------------------------------
# Full forward pass of the Conv1d module
# ----------------------------------------------------------------------------
def conv1d_block_forward(x, weight, bias, shuffle_key, *,
                         stride=4, padding=11, alpha=0.2, shift_factor=2,
                         time_tile=256, use_bf16=True):
    N, Cin, L = x.shape
    Cout, _, K = weight.shape
    S = stride
    Lp = L + 2 * padding
    L_out = (Lp - K) // S + 1

    DQ = -(-K // S)                              # ceil(K / stride)
    H = max(8, ((DQ - 1 + 7) // 8) * 8)          # halo (decimated samples) >= DQ-1

    # --- time tiling (lane dim of the output) ---
    if L_out > time_tile:
        T = time_tile                            # multiple of 128
        assert T % 128 == 0
        J = -(-L_out // T)
        Lq = J * T
    else:
        T, J, Lq = L_out, 1, L_out               # full-dim block: no 128 constraint

    # --- glue: zero-pad + phase decomposition (reads x once, no K-x blowup) ---
    P_total = max(Lq + H, -(-Lp // S))           # decimated length incl. halo
    xp = jnp.pad(x, ((0, 0), (0, 0), (padding, padding + (P_total * S - Lp))))
    # x_ph[n, s*Cin+ci, p] = xp[n, ci, p*S + s]
    x_ph = xp.reshape(N, Cin, P_total, S).transpose(0, 3, 1, 2)
    x_ph = x_ph.reshape(N, S * Cin, P_total)
    # overlapping per-tile slabs (overlap = tiny halo, ~H/T extra traffic)
    win = jnp.arange(J)[:, None] * T + jnp.arange(T + H)[None, :]   # (J, T+H)
    x_slab = x_ph[:, :, win]                                        # (N, SC, J, T+H)
    x_slab = x_slab.transpose(0, 2, 1, 3).reshape(N * J, S * Cin, T + H)

    # --- pack weights: W_packed[dq, co, s*Cin+ci] = W[co, ci, dq*S+s] (0-padded) ---
    w_pad = jnp.pad(weight, ((0, 0), (0, 0), (0, DQ * S - K)))
    w_packed = w_pad.reshape(Cout, Cin, DQ, S).transpose(2, 0, 3, 1)
    w_packed = w_packed.reshape(DQ, Cout, S * Cin)

    if use_bf16:
        x_slab = x_slab.astype(jnp.bfloat16)
        w_packed = w_packed.astype(jnp.bfloat16)
    b2d = bias.reshape(Cout, 1).astype(jnp.float32)

    # --- Pallas hot path: conv (as DQ matmuls) + bias + LeakyReLU ---
    out = _conv_leakyrelu_pallas(x_slab, w_packed, b2d,
                                 N=N, J=J, T=T, H=H, DQ=DQ, Cout=Cout,
                                 SC=S * Cin, Lq=Lq, alpha=alpha)
    out = out[:, :, :L_out]                      # drop tile padding (NCL layout)

    # --- PhaseShuffle (data-dependent per-batch time gather, plain-JAX glue) ---
    if shift_factor > 0:
        k_list = jax.random.randint(shuffle_key, (N,), 0,
                                    2 * shift_factor + 1) - shift_factor
        src = _phase_shuffle_indices(k_list, L_out)   # (N, L_out)
        out = jnp.take_along_axis(out, src[:, None, :], axis=2)
        return out, k_list
    return out, jnp.zeros((N,), jnp.int32)


# ----------------------------------------------------------------------------
# Pure-JAX reference (for correctness check)
# ----------------------------------------------------------------------------
def _reference(x, weight, bias, k_list, *, stride, padding, alpha):
    y = jax.lax.conv_general_dilated(
        x, weight, window_strides=(stride,), padding=[(padding, padding)],
        dimension_numbers=("NCH", "OIH", "NCH"))
    y = y + bias[None, :, None]
    y = jnp.where(y >= 0, y, alpha * y)
    src = _phase_shuffle_indices(k_list, y.shape[-1])
    return jnp.take_along_axis(y, src[:, None, :], axis=2)


if __name__ == "__main__":
    # Small shapes consistent with the module (WaveGAN-style kernel/stride).
    N, Cin, Cout, K, L = 2, 4, 8, 25, 64
    stride, padding, alpha, shift_factor = 4, 11, 0.2, 2

    root = jax.random.PRNGKey(0)
    k_x, k_w, k_b, k_shuf = jax.random.split(root, 4)

    x = jax.random.normal(k_x, (N, Cin, L), dtype=jnp.float32)
    fan_in = Cin * K
    weight = jax.random.normal(k_w, (Cout, Cin, K), dtype=jnp.float32) / jnp.sqrt(fan_in)
    bias = jax.random.normal(k_b, (Cout,), dtype=jnp.float32) * 0.01

    # Pre-round x / W through bf16 so the kernel's bf16 MXU path and the f32
    # reference see identical input values (products are then exact in f32;
    # only accumulation order differs).
    x = x.astype(jnp.bfloat16).astype(jnp.float32)
    weight = weight.astype(jnp.bfloat16).astype(jnp.float32)

    out, k_list = conv1d_block_forward(
        x, weight, bias, k_shuf,
        stride=stride, padding=padding, alpha=alpha, shift_factor=shift_factor)
    out = jax.block_until_ready(out)

    ref = _reference(x, weight, bias, k_list,
                     stride=stride, padding=padding, alpha=alpha)
    assert out.shape == ref.shape, (out.shape, ref.shape)
    max_err = float(jnp.max(jnp.abs(out - ref)))
    assert jnp.allclose(out, ref, atol=2e-3, rtol=2e-3), f"mismatch, max_err={max_err}"

    print("KERNEL_OK")
</pallas_src>

<mosaic_0001>
module attributes {stable_mosaic.version = 11 : i64} {
  func.func @_conv_kernel(%arg0: i32, %arg1: i32, %arg2: memref<1x16x24xbf16, #tpu.memory_space<vmem>>, %arg3: memref<7x8x16xbf16, #tpu.memory_space<vmem>>, %arg4: memref<8x1xf32, #tpu.memory_space<vmem>>, %arg5: memref<1x8x16xf32, #tpu.memory_space<vmem>>) attributes {dimension_semantics = [#tpu.dimension_semantics<parallel>, #tpu.dimension_semantics<parallel>], iteration_bounds = array<i64: 2, 1>, scalar_prefetch = 0 : i64, scratch_operands = 0 : i64, tpu.core_type = #tpu.core_type<tc>, window_params = [{transform_indices = @transform_0, window_bounds = array<i64: 1, 16, 24>}, {pipeline_mode = #tpu.pipeline_mode<synchronous>, transform_indices = @transform_1, window_bounds = array<i64: 7, 8, 16>}, {pipeline_mode = #tpu.pipeline_mode<synchronous>, transform_indices = @transform_2, window_bounds = array<i64: 8, 1>}, {transform_indices = @transform_3, window_bounds = array<i64: 1, 8, 16>}]} {
    %c0 = arith.constant 0 : index
    %c0_0 = arith.constant 0 : index
    %c0_1 = arith.constant 0 : index
    %0 = vector.load %arg2[%c0, %c0_0, %c0_1] : memref<1x16x24xbf16, #tpu.memory_space<vmem>>, vector<1x16x24xbf16>
    %1 = vector.shape_cast %0 : vector<1x16x24xbf16> to vector<16x24xbf16>
    %c0_2 = arith.constant 0 : index
    %c0_3 = arith.constant 0 : index
    %c0_4 = arith.constant 0 : index
    %2 = vector.load %arg3[%c0_2, %c0_3, %c0_4] : memref<7x8x16xbf16, #tpu.memory_space<vmem>>, vector<1x8x16xbf16>
    %3 = vector.shape_cast %2 : vector<1x8x16xbf16> to vector<8x16xbf16>
    %4 = vector.extract_strided_slice %1 {offsets = [0, 0], sizes = [16, 16], strides = [1, 1]} : vector<16x24xbf16> to vector<16x16xbf16>
    %cst = arith.constant dense<0.000000e+00> : vector<8x16xf32>
    %5 = tpu.matmul %3, %4, %cst {dimension_numbers = #tpu.dot_dimension_numbers<[1], [0], [0], [1], [0, 0, 1, 1], [], []>} : vector<8x16xbf16>, vector<16x16xbf16>, vector<8x16xf32> -> vector<8x16xf32>
    %c1 = arith.constant 1 : index
    %c0_5 = arith.constant 0 : index
    %c0_6 = arith.constant 0 : index
    %6 = vector.load %arg3[%c1, %c0_5, %c0_6] : memref<7x8x16xbf16, #tpu.memory_space<vmem>>, vector<1x8x16xbf16>
    %7 = vector.shape_cast %6 : vector<1x8x16xbf16> to vector<8x16xbf16>
    %8 = vector.extract_strided_slice %1 {offsets = [0, 1], sizes = [16, 16], strides = [1, 1]} : vector<16x24xbf16> to vector<16x16xbf16>
    %cst_7 = arith.constant dense<0.000000e+00> : vector<8x16xf32>
    %9 = tpu.matmul %7, %8, %cst_7 {dimension_numbers = #tpu.dot_dimension_numbers<[1], [0], [0], [1], [0, 0, 1, 1], [], []>} : vector<8x16xbf16>, vector<16x16xbf16>, vector<8x16xf32> -> vector<8x16xf32>
    %10 = arith.addf %5, %9 : vector<8x16xf32>
    %c2 = arith.constant 2 : index
    %c0_8 = arith.constant 0 : index
    %c0_9 = arith.constant 0 : index
    %11 = vector.load %arg3[%c2, %c0_8, %c0_9] : memref<7x8x16xbf16, #tpu.memory_space<vmem>>, vector<1x8x16xbf16>
    %12 = vector.shape_cast %11 : vector<1x8x16xbf16> to vector<8x16xbf16>
    %13 = vector.extract_strided_slice %1 {offsets = [0, 2], sizes = [16, 16], strides = [1, 1]} : vector<16x24xbf16> to vector<16x16xbf16>
    %cst_10 = arith.constant dense<0.000000e+00> : vector<8x16xf32>
    %14 = tpu.matmul %12, %13, %cst_10 {dimension_numbers = #tpu.dot_dimension_numbers<[1], [0], [0], [1], [0, 0, 1, 1], [], []>} : vector<8x16xbf16>, vector<16x16xbf16>, vector<8x16xf32> -> vector<8x16xf32>
    %15 = arith.addf %10, %14 : vector<8x16xf32>
    %c3 = arith.constant 3 : index
    %c0_11 = arith.constant 0 : index
    %c0_12 = arith.constant 0 : index
    %16 = vector.load %arg3[%c3, %c0_11, %c0_12] : memref<7x8x16xbf16, #tpu.memory_space<vmem>>, vector<1x8x16xbf16>
    %17 = vector.shape_cast %16 : vector<1x8x16xbf16> to vector<8x16xbf16>
    %18 = vector.extract_strided_slice %1 {offsets = [0, 3], sizes = [16, 16], strides = [1, 1]} : vector<16x24xbf16> to vector<16x16xbf16>
    %cst_13 = arith.constant dense<0.000000e+00> : vector<8x16xf32>
    %19 = tpu.matmul %17, %18, %cst_13 {dimension_numbers = #tpu.dot_dimension_numbers<[1], [0], [0], [1], [0, 0, 1, 1], [], []>} : vector<8x16xbf16>, vector<16x16xbf16>, vector<8x16xf32> -> vector<8x16xf32>
    %20 = arith.addf %15, %19 : vector<8x16xf32>
    %c4 = arith.constant 4 : index
    %c0_14 = arith.constant 0 : index
    %c0_15 = arith.constant 0 : index
    %21 = vector.load %arg3[%c4, %c0_14, %c0_15] : memref<7x8x16xbf16, #tpu.memory_space<vmem>>, vector<1x8x16xbf16>
    %22 = vector.shape_cast %21 : vector<1x8x16xbf16> to vector<8x16xbf16>
    %23 = vector.extract_strided_slice %1 {offsets = [0, 4], sizes = [16, 16], strides = [1, 1]} : vector<16x24xbf16> to vector<16x16xbf16>
    %cst_16 = arith.constant dense<0.000000e+00> : vector<8x16xf32>
    %24 = tpu.matmul %22, %23, %cst_16 {dimension_numbers = #tpu.dot_dimension_numbers<[1], [0], [0], [1], [0, 0, 1, 1], [], []>} : vector<8x16xbf16>, vector<16x16xbf16>, vector<8x16xf32> -> vector<8x16xf32>
    %25 = arith.addf %20, %24 : vector<8x16xf32>
    %c5 = arith.constant 5 : index
    %c0_17 = arith.constant 0 : index
    %c0_18 = arith.constant 0 : index
    %26 = vector.load %arg3[%c5, %c0_17, %c0_18] : memref<7x8x16xbf16, #tpu.memory_space<vmem>>, vector<1x8x16xbf16>
    %27 = vector.shape_cast %26 : vector<1x8x16xbf16> to vector<8x16xbf16>
    %28 = vector.extract_strided_slice %1 {offsets = [0, 5], sizes = [16, 16], strides = [1, 1]} : vector<16x24xbf16> to vector<16x16xbf16>
    %cst_19 = arith.constant dense<0.000000e+00> : vector<8x16xf32>
    %29 = tpu.matmul %27, %28, %cst_19 {dimension_numbers = #tpu.dot_dimension_numbers<[1], [0], [0], [1], [0, 0, 1, 1], [], []>} : vector<8x16xbf16>, vector<16x16xbf16>, vector<8x16xf32> -> vector<8x16xf32>
    %30 = arith.addf %25, %29 : vector<8x16xf32>
    %c6 = arith.constant 6 : index
    %c0_20 = arith.constant 0 : index
    %c0_21 = arith.constant 0 : index
    %31 = vector.load %arg3[%c6, %c0_20, %c0_21] : memref<7x8x16xbf16, #tpu.memory_space<vmem>>, vector<1x8x16xbf16>
    %32 = vector.shape_cast %31 : vector<1x8x16xbf16> to vector<8x16xbf16>
    %33 = vector.extract_strided_slice %1 {offsets = [0, 6], sizes = [16, 16], strides = [1, 1]} : vector<16x24xbf16> to vector<16x16xbf16>
    %cst_22 = arith.constant dense<0.000000e+00> : vector<8x16xf32>
    %34 = tpu.matmul %32, %33, %cst_22 {dimension_numbers = #tpu.dot_dimension_numbers<[1], [0], [0], [1], [0, 0, 1, 1], [], []>} : vector<8x16xbf16>, vector<16x16xbf16>, vector<8x16xf32> -> vector<8x16xf32>
    %35 = arith.addf %30, %34 : vector<8x16xf32>
    %c0_23 = arith.constant 0 : index
    %c0_24 = arith.constant 0 : index
    %36 = vector.load %arg4[%c0_23, %c0_24] : memref<8x1xf32, #tpu.memory_space<vmem>>, vector<8x1xf32>
    %37 = vector.broadcast %36 : vector<8x1xf32> to vector<8x16xf32>
    %38 = arith.addf %35, %37 : vector<8x16xf32>
    %cst_25 = arith.constant 2.000000e-01 : f32
    %39 = vector.broadcast %cst_25 : f32 to vector<8x16xf32>
    %40 = arith.mulf %39, %38 : vector<8x16xf32>
    %41 = arith.maximumf %38, %40 : vector<8x16xf32>
    %c0_26 = arith.constant 0 : index
    %c0_27 = arith.constant 0 : index
    %c0_28 = arith.constant 0 : index
    %42 = vector.load %arg5[%c0_26, %c0_27, %c0_28] : memref<1x8x16xf32, #tpu.memory_space<vmem>>, vector<1x8x16xf32>
    %43 = vector.shape_cast %42 : vector<1x8x16xf32> to vector<8x16xf32>
    %44 = vector.shape_cast %41 : vector<8x16xf32> to vector<1x8x16xf32>
    tpu.vector_store %arg5[%c0_26, %c0_27, %c0_28], %44 {strides = array<i32>} : memref<1x8x16xf32, #tpu.memory_space<vmem>>, vector<1x8x16xf32>,
    return
  }
  func.func @transform_0(%arg0: i32, %arg1: i32) -> (i32, i32, i32) {
    %c1_i32 = arith.constant 1 : i32
    %0 = arith.muli %arg0, %c1_i32 : i32
    %1 = arith.addi %0, %arg1 : i32
    %c0_i32 = arith.constant 0 : i32
    %c0_i32_0 = arith.constant 0 : i32
    %c0_i32_1 = arith.constant 0 : i32
    return %1, %c0_i32, %c0_i32_0 : i32, i32, i32
  }
  func.func @transform_1(%arg0: i32, %arg1: i32) -> (i32, i32, i32) {
    %c0_i32 = arith.constant 0 : i32
    %c0_i32_0 = arith.constant 0 : i32
    %c0_i32_1 = arith.constant 0 : i32
    %c0_i32_2 = arith.constant 0 : i32
    return %c0_i32, %c0_i32_0, %c0_i32_1 : i32, i32, i32
  }
  func.func @transform_2(%arg0: i32, %arg1: i32) -> (i32, i32) {
    %c0_i32 = arith.constant 0 : i32
    %c0_i32_0 = arith.constant 0 : i32
    %c0_i32_1 = arith.constant 0 : i32
    return %c0_i32, %c0_i32_0 : i32, i32
  }
  func.func @transform_3(%arg0: i32, %arg1: i32) -> (i32, i32, i32) {
    %c0_i32 = arith.constant 0 : i32
    %c0_i32_0 = arith.constant 0 : i32
    return %arg0, %c0_i32, %arg1 : i32, i32, i32
  }
}

</mosaic_0001>

<llo_original>
// kernel: tpu_custom_call.1
$region0: #{tpu_custom_call.1}
  #allocation0 [shape = 'u32[]', space=smem, size = 0x4, offset = 0x4, fixed_abs, tag = 'smem constant byte address 0x4 - core index']
  #allocation1 [shape = 'u32[72,128]{1,0:T(1,128)}', space=vmem, size = 0x9000, scoped, tag = 'internal scratch']
  %s0 = inlined_call_operand.hbm [shape: bf16[2,16,24], index: 0, kind: input, shape index: {}]
  %s1 = inlined_call_operand.hbm [shape: bf16[7,8,16], index: 1, kind: input, shape index: {}]
  %s2 = inlined_call_operand.vmem [shape: f32[8,1], index: 2, kind: input, shape index: {}]
  %s3 = inlined_call_operand.hbm [shape: f32[2,8,16], index: 3, kind: output, shape index: {}]
  %s4 = sld [smem:[#allocation0]]
  $region53: #{tpu_custom_call.1} parent=0
    _
  %s6 = ssub.s32 1, %s4
  %s7 = scalar_select 0, %s6, %s4
  $region1: #{tpu_custom_call.1} parent=0
    #allocation2 [shape = 'u8[8192]{0}', space=vmem, size = 0x2000, scoped, tag = 'input window, operand 0']
    #allocation3 [shape = 's32[2]{0}', space=sflag, size = 0x8, scoped, tag = 'scoped memory for tpu_custom_call.1']
    #allocation4 [shape = 's32[2]{0}', space=sflag, size = 0x8, scoped, tag = 'scoped memory for tpu_custom_call.1']
    #allocation5 [shape = 'u8[14336]{0}', space=vmem, size = 0x3800, scoped, tag = 'input window, operand 1, single buffered']
    #allocation6 [shape = 's32[1]{0}', space=sflag, size = 0x4, scoped, tag = 'scoped memory for tpu_custom_call.1']
    #allocation7 [shape = 'u8[8192]{0}', space=vmem, size = 0x2000, scoped, tag = 'output window, operand 0']
    %8 = vsyncpa [#allocation3], 0
    %s9 = scalar_lea.sflag [#allocation3], 1
    %10 = vsyncpa %s9, 0
    %11 = vsyncpa [#allocation6], 0
    %12 = vsyncpa [#allocation4], 0
    %s13 = scalar_lea.sflag [#allocation4], 1
    %14 = vsyncpa %s13, 0
    loop: start=0, step=1, limit=4
    $region2: #{tpu_custom_call.1} parent=1 // loop_pre_header
      _
    $region3: #{tpu_custom_call.1} parent=1 // loop_header
      %s16 = sphi 0, %s20
      %p17 = scmp.ge.s32.totalorder %s16, 4
      %s23 = sphi 0, %s35
      %s24 = sphi 0, %s31
      %s25 = sphi 0, %s23
      %s26 = sphi 0, %s24
      %s27 = sphi 0, %s25
      %s28 = sphi 0, %s26
      %s40 = sphi 0, %s42
      %s43 = sphi 0, %s40
      %s44 = sphi 0, %s43
      %s60 = sphi 0, %s44
      %s64 = sphi 0, %s64
      %s66 = sphi 0, %s64
      %s67 = sphi 0, %s66
      %s81 = sphi 0, %s67
      %s85 = sphi 0, %s85
      %s87 = sphi 0, %s85
      %s88 = sphi 0, %s87
      %s102 = sphi 0, %s88
      %s110 = sphi 0, %s112
      %s113 = sphi 0, %s110
      %s114 = sphi 0, %s113
      %s130 = sphi 0, %s114
    $region4: #{tpu_custom_call.1} parent=1 // loop_header_branch
      %19 = sbr.rel (%p17) target = $region8
    $region5: #{tpu_custom_call.1} parent=1 // loop_body
      %s21 = ssub.s32 %s16, 1
      %s22 = ssub.s32 %s16, 2
      %s29 = sadd.s32 1, %s24
      %p30 = scmp.ge.s32.totalorder %s29, 1
      %s31 = scalar_select %p30, 0, %s29
      %s32 = sadd.s32 1, %s23
      %s33 = scalar_select %p30, %s32, %s23
      %p34 = scmp.ge.s32.totalorder %s33, 2
      %s35 = scalar_select %p34, 0, %s33
      %s36 = sadd.s32 %s23, %s24
      %s37 = sadd.s32 %s35, %s31
      %s38 = ssub.s32 %s36, %s37
      %p39 = scmp.eq.s32.totalorder %s38, 0
      %s41 = sadd.s32 %s40, 1
      %s42 = scalar_select %p39, %s40, %s41
      %p45 = pneg %p39
      %p46 = scmp.eq.s32.totalorder %s16, 1
      %p47 = por %p45, %p46
      %p48 = scmp.ne.s32.totalorder %s40, %s43
      %p49 = scmp.eq.s32.totalorder %s16, 0
      %p50 = por %p48, %p49
      %p51 = scmp.ne.s32.totalorder %s40, %s43
      %p52 = scmp.eq.s32.totalorder %s21, 1
      %p53 = por %p51, %p52
      %p54 = scmp.ne.s32.totalorder %s43, %s44
      %p55 = scmp.eq.s32.totalorder %s21, 0
      %p56 = por %p54, %p55
      %p57 = scmp.ne.s32.totalorder %s43, %s44
      %p58 = scmp.eq.s32.totalorder %s22, 1
      %p59 = por %p57, %p58
      %p61 = scmp.ne.s32.totalorder %s44, %s60
      %p62 = scmp.eq.s32.totalorder %s22, 0
      %p63 = por %p61, %p62
      %s65 = sadd.s32 %s64, 1
      %p68 = scmp.eq.s32.totalorder %s16, 1
      %p69 = scmp.ne.s32.totalorder %s64, %s66
      %p70 = scmp.eq.s32.totalorder %s16, 0
      %p71 = por %p69, %p70
      %p72 = scmp.ne.s32.totalorder %s64, %s66
      %p73 = scmp.eq.s32.totalorder %s21, 1
      %p74 = por %p72, %p73
      %p75 = scmp.ne.s32.totalorder %s66, %s67
      %p76 = scmp.eq.s32.totalorder %s21, 0
      %p77 = por %p75, %p76
      %p78 = scmp.ne.s32.totalorder %s66, %s67
      %p79 = scmp.eq.s32.totalorder %s22, 1
      %p80 = por %p78, %p79
      %p82 = scmp.ne.s32.totalorder %s67, %s81
      %p83 = scmp.eq.s32.totalorder %s22, 0
      %p84 = por %p82, %p83
      %s86 = sadd.s32 %s85, 1
      %p89 = scmp.eq.s32.totalorder %s16, 1
      %p90 = scmp.ne.s32.totalorder %s85, %s87
      %p91 = scmp.eq.s32.totalorder %s16, 0
      %p92 = por %p90, %p91
      %p93 = scmp.ne.s32.totalorder %s85, %s87
      %p94 = scmp.eq.s32.totalorder %s21, 1
      %p95 = por %p93, %p94
      %p96 = scmp.ne.s32.totalorder %s87, %s88
      %p97 = scmp.eq.s32.totalorder %s21, 0
      %p98 = por %p96, %p97
      %p99 = scmp.ne.s32.totalorder %s87, %s88
      %p100 = scmp.eq.s32.totalorder %s22, 1
      %p101 = por %p99, %p100
      %p103 = scmp.ne.s32.totalorder %s88, %s102
      %p104 = scmp.eq.s32.totalorder %s22, 0
      %p105 = por %p103, %p104
      %s106 = ssub.s32 %s23, %s35
      %s107 = ssub.s32 %s24, %s31
      %s108 = sor.u32 %s106, %s107
      %p109 = scmp.eq.s32.totalorder %s108, 0
      %s111 = sadd.s32 %s110, 1
      %s112 = scalar_select %p109, %s110, %s111
      %p115 = pneg %p109
      %p116 = scmp.eq.s32.totalorder %s16, 1
      %p117 = por %p115, %p116
      %p118 = scmp.ne.s32.totalorder %s110, %s113
      %p119 = scmp.eq.s32.totalorder %s16, 0
      %p120 = por %p118, %p119
      %p121 = scmp.ne.s32.totalorder %s110, %s113
      %p122 = scmp.eq.s32.totalorder %s21, 1
      %p123 = por %p121, %p122
      %p124 = scmp.ne.s32.totalorder %s113, %s114
      %p125 = scmp.eq.s32.totalorder %s21, 0
      %p126 = por %p124, %p125
      %p127 = scmp.ne.s32.totalorder %s113, %s114
      %p128 = scmp.eq.s32.totalorder %s22, 1
      %p129 = por %p127, %p128
      %p131 = scmp.ne.s32.totalorder %s114, %s130
      %p132 = scmp.eq.s32.totalorder %s22, 0
      %p133 = por %p131, %p132
      %p134 = scmp.le.s32.totalorder 1, %s16
      %p135 = scmp.lt.s32.totalorder %s16, 3
      %p136 = pnand %p134, %p135
      %p137 = pneg %p136
      // Predicated region
      $region9: #{tpu_custom_call.1} parent=5 // pred_check
        _
      $region10: #{tpu_custom_call.1} parent=5 // pred_check_branch
        %139 = sbr.rel (%p136) target = $region12
      $region11: #{tpu_custom_call.1} parent=5 // pred_region
        %s140 = ssub.s32 %s16, 1
        // Predicated region
        $region13: #{tpu_custom_call.1} parent=11 // pred_check
          %p141 = pneg %p77
        $region14: #{tpu_custom_call.1} parent=11 // pred_check_branch
          %143 = sbr.rel (%p141) target = $region16
        $region15: #{tpu_custom_call.1} parent=11 // pred_region
          %145 = vsyncadd [#allocation6], 0
          %s146 = sshll.u32 %s1, 4
          %s147 = int_to_ptr.hbm [resolvable:$true] %s146
          %s148 = sshll.u32 [#allocation5], 4
          %s149 = int_to_ptr.vmem [resolvable:$true] %s148
          %154 = dma.hbm_to_vmem [thread:$0]  %s147, 448, %s149, [#allocation6], 64, 64, 4
        $region16: #{tpu_custom_call.1} parent=11 // pred_fallthru
          _
        // Predicated region
        $region17: #{tpu_custom_call.1} parent=11 // pred_check
          %p155 = pneg %p98
        $region18: #{tpu_custom_call.1} parent=11 // pred_check_branch
          %157 = sbr.rel (%p155) target = $region20
        $region19: #{tpu_custom_call.1} parent=11 // pred_region
          _
        $region20: #{tpu_custom_call.1} parent=11 // pred_fallthru
          _
      $region12: #{tpu_custom_call.1} parent=5 // pred_fallthru
        _
      %p158 = scmp.lt.s32.totalorder %s16, 2
      // Predicated region
      $region21: #{tpu_custom_call.1} parent=5 // pred_check
        %p159 = pneg %p158
      $region22: #{tpu_custom_call.1} parent=5 // pred_check_branch
        %161 = sbr.rel (%p159) target = $region24
      $region23: #{tpu_custom_call.1} parent=5 // pred_region
        // Predicated region
        $region25: #{tpu_custom_call.1} parent=23 // pred_check
          %p162 = pneg %p50
        $region26: #{tpu_custom_call.1} parent=23 // pred_check_branch
          %164 = sbr.rel (%p162) target = $region28
        $region27: #{tpu_custom_call.1} parent=23 // pred_region
          %s165 = sand.u32 %s40, 1
          %s166 = scalar_lea.sflag [#allocation3], %s165
          %s167 = sand.u32 %s40, 1
          %s168 = smul.addr %s167, 8
          %s169 = scalar_lea.vmem [#allocation2], %s168
          %s170 = sadd.s32 %s23, %s24
          %172 = vsyncadd %s166, 0
          %s173 = smul.addr %s170, 2
          %s174 = smul.addr %s173, 4
          %s175 = scalar_lea.hbm %s0, %s174
          %s176 = sshll.u32 %s175, 4
          %s177 = int_to_ptr.hbm [resolvable:$true] %s176
          %s178 = sshll.u32 %s169, 4
          %s179 = int_to_ptr.vmem [resolvable:$true] %s178
          %184 = dma.hbm_to_vmem [thread:$0]  %s177, 128, %s179, %s166, 64, 64, 4
        $region28: #{tpu_custom_call.1} parent=23 // pred_fallthru
          _
      $region24: #{tpu_custom_call.1} parent=5 // pred_fallthru
        _
      %p185 = scmp.le.s32.totalorder 1, %s16
      %p186 = scmp.lt.s32.totalorder %s16, 3
      %p187 = pnand %p185, %p186
      %p188 = pneg %p187
      // Predicated region
      $region29: #{tpu_custom_call.1} parent=5 // pred_check
        _
      $region30: #{tpu_custom_call.1} parent=5 // pred_check_branch
        %190 = sbr.rel (%p187) target = $region32
      $region31: #{tpu_custom_call.1} parent=5 // pred_region
        %s191 = ssub.s32 %s16, 1
        %s192 = sand.u32 %s43, 1
        %s193 = scalar_lea.sflag [#allocation3], %s192
        %s194 = sand.u32 %s43, 1
        %s195 = smul.addr %s194, 8
        %s196 = scalar_lea.vmem [#allocation2], %s195
        // Predicated region
        $region33: #{tpu_custom_call.1} parent=31 // pred_check
          %p197 = pneg %p56
        $region34: #{tpu_custom_call.1} parent=31 // pred_check_branch
          %199 = sbr.rel (%p197) target = $region36
        $region35: #{tpu_custom_call.1} parent=31 // pred_region
          %201 = dma.done %s193, 128
        $region36: #{tpu_custom_call.1} parent=31 // pred_fallthru
          _
        // Predicated region
        $region37: #{tpu_custom_call.1} parent=31 // pred_check
          %p202 = pneg %p77
        $region38: #{tpu_custom_call.1} parent=31 // pred_check_branch
          %204 = sbr.rel (%p202) target = $region40
        $region39: #{tpu_custom_call.1} parent=31 // pred_region
          %206 = dma.done [#allocation6], 448
        $region40: #{tpu_custom_call.1} parent=31 // pred_fallthru
          _
        %s207 = sand.u32 %s43, 1
        %s208 = scalar_lea.sflag [#allocation3], %s207
        %s209 = sand.u32 %s43, 1
        %s210 = smul.addr %s209, 8
        %s211 = scalar_lea.vmem [#allocation2], %s210
        %p212 = pneg %p56
        %p213 = pneg %p53
        %p214 = pneg %p77
        %p215 = pneg %p74
        %p216 = pneg %p98
        %p217 = pneg %p95
        %p218 = pneg %p126
        %p219 = pneg %p123
        %s220 = sand.u32 %s113, 1
        %s221 = scalar_lea.sflag [#allocation4], %s220
        %s222 = sand.u32 %s113, 1
        %s223 = smul.addr %s222, 8
        %s224 = scalar_lea.vmem [#allocation7], %s223
        %s225 = sadd.s32 %s25, %s26
        %v227 = vld [vmem:[%s196] sm:$0xf]
        %v228 = vld [vmem:[%s196 + $0x4] sm:$0xf]
        %v229 = vld [vmem:[#allocation5] sm:$0xf]
        %s230 = scalar_lea.vmem [#allocation5], 4
        %v231 = vld [vmem:[%s230] sm:$0xf]
        %v234 = vunpack.c.l.b16 %v227
        %v235 = vunpack.c.l.b16 %v228
        %v236 = vpack.c.b16 %v235, %v234
        %237 = vrot.lane.b32.xlu0 %v236, 127
        %v238 = vpop.permute.xlu0 %237
        %vm240 = vcmask 130048
        %v242 = vsel %vm240, %v231, 0
        %244 = vmatpush.bf16.msra.mxu0 0
        %245 = vmatpush.bf16.msra.mxu0 0
        %246 = vmatpush.bf16.msra.mxu0 0
        %247 = vmatpush.bf16.msra.mxu0 0
        %248 = vmatpush.bf16.msra.mxu0 0
        %249 = vmatpush.bf16.msra.mxu0 0
        %250 = vmatpush.bf16.msra.mxu0 0
        %251 = vmatpush.bf16.msra.mxu0 %v238
        %252 = vmatmul.bf16.gmra.mxu0 %v242
        %v253 = vpop.f32.mrf.mxu0
        %v254 = vadd.f32 0.0, %v253
        %v255 = vpop.f32.mrf.mxu0
        %256 = vdwg.mxu0
        %v259 = vsel %vm240, %v229, 0
        %261 = vmatpush.bf16.msra.mxu0 0
        %262 = vmatpush.bf16.msra.mxu0 0
        %263 = vmatpush.bf16.msra.mxu0 0
        %264 = vmatpush.bf16.msra.mxu0 0
        %265 = vmatpush.bf16.msra.mxu0 0
        %266 = vmatpush.bf16.msra.mxu0 0
        %267 = vmatpush.bf16.msra.mxu0 0
        %268 = vmatpush.bf16.msra.mxu0 %v236
        %269 = vmatmul.bf16.gmra.mxu0 %v259
        %v270 = vpop.f32.mrf.mxu0
        %v271 = vadd.f32 %v254, %v270
        %v272 = vpop.f32.mrf.mxu0
        %273 = vdwg.mxu0
        %s274 = scalar_lea.vmem [#allocation5], 8
        %v275 = vld [vmem:[%s274] sm:$0xf]
        %276 = vrot.lane.b32.xlu0 %v236, 126
        %v277 = vpop.permute.xlu0 %276
        %v280 = vsel %vm240, %v275, 0
        %282 = vmatpush.bf16.msra.mxu0 0
        %283 = vmatpush.bf16.msra.mxu0 0
        %284 = vmatpush.bf16.msra.mxu0 0
        %285 = vmatpush.bf16.msra.mxu0 0
        %286 = vmatpush.bf16.msra.mxu0 0
        %287 = vmatpush.bf16.msra.mxu0 0
        %288 = vmatpush.bf16.msra.mxu0 0
        %289 = vmatpush.bf16.msra.mxu0 %v277
        %290 = vmatmul.bf16.gmra.mxu0 %v280
        %v291 = vpop.f32.mrf.mxu0
        %v292 = vadd.f32 0.0, %v291
        %v293 = vpop.f32.mrf.mxu0
        %294 = vdwg.mxu0
        %v295 = vadd.f32 %v271, %v292
        %s296 = scalar_lea.vmem [#allocation5], 12
        %v297 = vld [vmem:[%s296] sm:$0xf]
        %298 = vrot.lane.b32.xlu0 %v236, 125
        %v299 = vpop.permute.xlu0 %298
        %v302 = vsel %vm240, %v297, 0
        %304 = vmatpush.bf16.msra.mxu0 0
        %305 = vmatpush.bf16.msra.mxu0 0
        %306 = vmatpush.bf16.msra.mxu0 0
        %307 = vmatpush.bf16.msra.mxu0 0
        %308 = vmatpush.bf16.msra.mxu0 0
        %309 = vmatpush.bf16.msra.mxu0 0
        %310 = vmatpush.bf16.msra.mxu0 0
        %311 = vmatpush.bf16.msra.mxu0 %v299
        %312 = vmatmul.bf16.gmra.mxu0 %v302
        %v313 = vpop.f32.mrf.mxu0
        %v314 = vadd.f32 0.0, %v313
        %v315 = vpop.f32.mrf.mxu0
        %316 = vdwg.mxu0
        %v317 = vadd.f32 %v295, %v314
        %s318 = scalar_lea.vmem [#allocation5], 16
        %v319 = vld [vmem:[%s318] sm:$0xf]
        %320 = vrot.lane.b32.xlu0 %v236, 124
        %v321 = vpop.permute.xlu0 %320
        %v324 = vsel %vm240, %v319, 0
        %326 = vmatpush.bf16.msra.mxu0 0
        %327 = vmatpush.bf16.msra.mxu0 0
        %328 = vmatpush.bf16.msra.mxu0 0
        %329 = vmatpush.bf16.msra.mxu0 0
        %330 = vmatpush.bf16.msra.mxu0 0
        %331 = vmatpush.bf16.msra.mxu0 0
        %332 = vmatpush.bf16.msra.mxu0 0
        %333 = vmatpush.bf16.msra.mxu0 %v321
        %334 = vmatmul.bf16.gmra.mxu0 %v324
        %v335 = vpop.f32.mrf.mxu0
        %v336 = vadd.f32 0.0, %v335
        %v337 = vpop.f32.mrf.mxu0
        %338 = vdwg.mxu0
        %v339 = vadd.f32 %v317, %v336
        %s340 = scalar_lea.vmem [#allocation5], 20
        %v341 = vld [vmem:[%s340] sm:$0xf]
        %342 = vrot.lane.b32.xlu0 %v236, 123
        %v343 = vpop.permute.xlu0 %342
        %v346 = vsel %vm240, %v341, 0
        %348 = vmatpush.bf16.msra.mxu0 0
        %349 = vmatpush.bf16.msra.mxu0 0
        %350 = vmatpush.bf16.msra.mxu0 0
        %351 = vmatpush.bf16.msra.mxu0 0
        %352 = vmatpush.bf16.msra.mxu0 0
        %353 = vmatpush.bf16.msra.mxu0 0
        %354 = vmatpush.bf16.msra.mxu0 0
        %355 = vmatpush.bf16.msra.mxu0 %v343
        %356 = vmatmul.bf16.gmra.mxu0 %v346
        %v357 = vpop.f32.mrf.mxu0
        %v358 = vadd.f32 0.0, %v357
        %v359 = vpop.f32.mrf.mxu0
        %360 = vdwg.mxu0
        %v361 = vadd.f32 %v339, %v358
        %s362 = scalar_lea.vmem [#allocation5], 24
        %v363 = vld [vmem:[%s362] sm:$0xf]
        %364 = vrot.lane.b32.xlu0 %v236, 122
        %v365 = vpop.permute.xlu0 %364
        %v368 = vsel %vm240, %v363, 0
        %370 = vmatpush.bf16.msra.mxu0 0
        %371 = vmatpush.bf16.msra.mxu0 0
        %372 = vmatpush.bf16.msra.mxu0 0
        %373 = vmatpush.bf16.msra.mxu0 0
        %374 = vmatpush.bf16.msra.mxu0 0
        %375 = vmatpush.bf16.msra.mxu0 0
        %376 = vmatpush.bf16.msra.mxu0 0
        %377 = vmatpush.bf16.msra.mxu0 %v365
        %378 = vmatmul.bf16.gmra.mxu0 %v368
        %v379 = vpop.f32.mrf.mxu0
        %v380 = vadd.f32 0.0, %v379
        %v381 = vpop.f32.mrf.mxu0
        %382 = vdwg.mxu0
        %v383 = vadd.f32 %v361, %v380
        %v384 = vld [vmem:[%s2] sm:$0xff]
        %386 = vset.pattern.permute.xlu0 0
        %387 = vperm.xlu0 %386, %v384
        %v388 = vpop.permute.xlu0 %387
        %v390 = vadd.f32 %v383, %v388
        %v391 = vmul.f32 %v390, 0.2
        %v392 = vmax.f32 %v390, %v391
        %393 = vst.msk [vmem:[%s224] sm:$0xff] %vm240, %v392
        %s394 = sand.u32 %s113, 1
        %s395 = scalar_lea.sflag [#allocation4], %s394
        %s396 = sand.u32 %s113, 1
        %s397 = smul.addr %s396, 8
        %s398 = scalar_lea.vmem [#allocation7], %s397
        // Predicated region
        $region41: #{tpu_custom_call.1} parent=31 // pred_check
          %p399 = pneg %p123
        $region42: #{tpu_custom_call.1} parent=31 // pred_check_branch
          %401 = sbr.rel (%p399) target = $region44
        $region43: #{tpu_custom_call.1} parent=31 // pred_region
          %403 = vsyncadd %s395, 0
          %s404 = sadd.s32 %s26, %s25
          %s405 = smul.addr %s404, 8
          %s406 = scalar_lea.hbm %s3, %s405
          %s408 = sshll.u32 %s398, 4
          %s409 = int_to_ptr.vmem [resolvable:$true] %s408
          %s410 = sshll.u32 %s406, 4
          %s411 = int_to_ptr.hbm [resolvable:$true] %s410
          %413 = dma.vmem_to_hbm [thread:$0]  %s409, 128, %s411, %s395
        $region44: #{tpu_custom_call.1} parent=31 // pred_fallthru
          _
      $region32: #{tpu_custom_call.1} parent=5 // pred_fallthru
        _
      %p414 = scmp.le.s32.totalorder 2, %s16
      // Predicated region
      $region45: #{tpu_custom_call.1} parent=5 // pred_check
        %p415 = pneg %p414
      $region46: #{tpu_custom_call.1} parent=5 // pred_check_branch
        %417 = sbr.rel (%p415) target = $region48
      $region47: #{tpu_custom_call.1} parent=5 // pred_region
        %s418 = ssub.s32 %s16, 2
        // Predicated region
        $region49: #{tpu_custom_call.1} parent=47 // pred_check
          %p419 = pneg %p129
        $region50: #{tpu_custom_call.1} parent=47 // pred_check_branch
          %421 = sbr.rel (%p419) target = $region52
        $region51: #{tpu_custom_call.1} parent=47 // pred_region
          %s422 = sand.u32 %s114, 1
          %s423 = scalar_lea.sflag [#allocation4], %s422
          %s424 = sand.u32 %s114, 1
          %s425 = smul.addr %s424, 8
          %s426 = scalar_lea.vmem [#allocation7], %s425
          %428 = dma.done %s423, 128
        $region52: #{tpu_custom_call.1} parent=47 // pred_fallthru
          _
      $region48: #{tpu_custom_call.1} parent=5 // pred_fallthru
        _
    $region6: #{tpu_custom_call.1} parent=1 // loop_footer
      %s20 = sadd.s32 1, %s16
    $region7: #{tpu_custom_call.1} parent=1 // loop_footer_branch
      %15 = sbr.rel target = $region3
    $region8: #{tpu_custom_call.1} parent=1 // loop_exit
      _
    %429 = vsyncpa [#allocation3], 1
    %s430 = scalar_lea.sflag [#allocation3], 1
    %431 = vsyncpa %s430, 1
    %432 = vsyncpa [#allocation6], 1
    %433 = vsyncpa [#allocation4], 1
    %s434 = scalar_lea.sflag [#allocation4], 1
    %435 = vsyncpa %s434, 1

</llo_original>
